<compile_context>
chip_gen: v6e
topology: v6e:2x2x1
jax: 0.10.0
libtpu: 0.0.40
codegen_flags: <defaults>
</compile_context>

<pallas_src>
import functools

import jax
import jax.numpy as jnp
from jax import lax
from jax.experimental import pallas as pl
from jax.experimental.pallas import tpu as pltpu


def _round_up(x, m):
    return ((x + m - 1) // m) * m


def _lora_kernel(x_ref, wa_ref, wb_ref, o_ref, *, scale):
    # x_ref:  (tm, K)  activation row block (streamed over the M grid axis)
    # wa_ref: (R, K)   LoRA-A weight, PyTorch (out_features, in_features) layout
    # wb_ref: (N, R)   LoRA-B weight, PyTorch layout, fully resident
    # o_ref:  (tm, N)  full-width output slab for this row block
    logits = lax.dot_general(
        x_ref[...], wa_ref[...],
        dimension_numbers=(((1,), (1,)), ((), ())),       # x @ A.T -> (tm, R)
        preferred_element_type=jnp.float32,
    )
    # Scale the rank-sized logits (cheapest place) and cast once to the
    # B-weight dtype for the MXU; accumulation stays f32.
    logits = (logits * scale).astype(wb_ref.dtype)
    out = lax.dot_general(
        logits, wb_ref[...],
        dimension_numbers=(((1,), (1,)), ((), ())),       # logits @ B.T -> (tm, N)
        preferred_element_type=jnp.float32,
    )
    o_ref[...] = out.astype(o_ref.dtype)


def lora_forward(x, a_weight, b_weight, alpha=4, *, tm=256):
    """LoRA forward: (alpha/rank) * ((x @ a_weight.T) @ b_weight.T).

    x: (M, K); a_weight: (R, K); b_weight: (N, R) -- PyTorch nn.Linear layouts,
    consumed as-is (no transposes, no padding, no output slicing).
    """
    M, K = x.shape
    R, K2 = a_weight.shape
    N, R2 = b_weight.shape
    assert K == K2 and R == R2
    scale = float(alpha) / float(R)

    x_it = x.dtype.itemsize
    w_it = a_weight.dtype.itemsize
    o_it = x.dtype.itemsize

    # --- Row-tile sizing -----------------------------------------------------
    tm = max(8, (int(tm) // 8) * 8)            # keep the sublane dim 8-aligned
    tm = min(tm, _round_up(M, 8))
    # Megacore guard: if M can support >= 2 row tiles but tm gives only one,
    # split it so the "parallel" M axis can feed both v7x TensorCores.
    if pl.cdiv(M, tm) < 2 and M >= 16:
        tm = _round_up(pl.cdiv(M, 2), 8)

    # --- VMEM budget (v7x: 64 MiB physical; v5e/v6e: 128 MiB) ----------------
    try:
        vmem_phys = int(pltpu.get_tpu_info().vmem_capacity_bytes)
    except Exception:
        vmem_phys = 64 * 1024 * 1024           # conservative (v7x) fallback
    vmem_budget = (vmem_phys * 3) // 4         # leave compiler-scratch headroom

    def _vmem_needed(tm_):
        return (2 * tm_ * K * x_it             # x row block, double-buffered
                + 2 * R * K * w_it             # A resident (default 2 buffers, tiny)
                + 2 * N * R * w_it             # B resident (default 2 buffers, tiny)
                + 2 * tm_ * N * o_it)          # output slab, double-buffered

    while _vmem_needed(tm) > vmem_budget and tm > 8:
        tm = max(8, (tm // 2 // 8) * 8)

    vmem_limit = int(min(vmem_budget,
                         max(_vmem_needed(tm) + (4 << 20), 32 << 20)))

    n_m_tiles = pl.cdiv(M, tm)
    kernel = functools.partial(_lora_kernel, scale=scale)

    # Accurate advisory cost: every operand touches HBM exactly once.
    flops = 2 * M * K * R + 2 * M * R * N
    bytes_accessed = (M * K * x_it + R * K * w_it + N * R * w_it + M * N * o_it)

    out = pl.pallas_call(
        kernel,
        out_shape=jax.ShapeDtypeStruct((M, N), x.dtype),
        grid=(n_m_tiles,),
        in_specs=[
            pl.BlockSpec((tm, K), lambda i: (i, 0)),   # x row block (streamed)
            pl.BlockSpec((R, K), lambda i: (0, 0)),    # A resident, unpadded rank
            pl.BlockSpec((N, R), lambda i: (0, 0)),    # B resident: 1 HBM read total
        ],
        out_specs=pl.BlockSpec((tm, N), lambda i: (i, 0)),
        compiler_params=pltpu.CompilerParams(
            dimension_semantics=("parallel",),         # independent row blocks
            vmem_limit_bytes=vmem_limit,
        ),
        cost_estimate=pl.CostEstimate(
            flops=flops, transcendentals=0, bytes_accessed=bytes_accessed),
    )(x, a_weight, b_weight)

    return out


def _init_params(key, input_size, output_size, rank, dtype=jnp.float32):
    # Matches nn.init.kaiming_uniform_(a.weight, a=sqrt(5)):
    # bound = sqrt(6 / ((1 + a^2) * fan_in)) = 1 / sqrt(fan_in), fan_in = input_size
    bound = 1.0 / float(input_size) ** 0.5
    a_weight = jax.random.uniform(
        key, (rank, input_size), dtype=dtype, minval=-bound, maxval=bound
    )
    # nn.init.zeros_(b.weight)
    b_weight = jnp.zeros((output_size, rank), dtype=dtype)
    return a_weight, b_weight


if __name__ == "__main__":
    key = jax.random.PRNGKey(0)
    k_x, k_a, k_b, k_x2 = jax.random.split(key, 4)

    batch = 8
    input_size = 32
    output_size = 64
    rank = 8
    alpha = 4

    x = jax.random.normal(k_x, (batch, input_size), dtype=jnp.float32)
    a_weight, b_weight_init = _init_params(k_a, input_size, output_size, rank)

    # 1) Module-faithful init (B == 0) -> output must be exactly zero.
    out0 = jax.block_until_ready(lora_forward(x, a_weight, b_weight_init, alpha=alpha))
    assert out0.shape == (batch, output_size)
    assert jnp.allclose(out0, 0.0)

    # 2) Non-trivial B to exercise both matmuls + scale.
    b_weight = 0.1 * jax.random.normal(k_b, (output_size, rank), dtype=jnp.float32)
    out = jax.block_until_ready(lora_forward(x, a_weight, b_weight, alpha=alpha))
    ref = (alpha / rank) * ((x @ a_weight.T) @ b_weight.T)
    assert out.shape == (batch, output_size)
    assert jnp.allclose(out, ref, atol=1e-3, rtol=1e-3), float(jnp.max(jnp.abs(out - ref)))

    # 3) Ragged / multi-tile M (exercises boundary-block masking + megacore split).
    x2 = jax.random.normal(k_x2, (33, input_size), dtype=jnp.float32)
    out2 = jax.block_until_ready(lora_forward(x2, a_weight, b_weight, alpha=alpha))
    ref2 = (alpha / rank) * ((x2 @ a_weight.T) @ b_weight.T)
    assert out2.shape == (33, output_size)
    assert jnp.allclose(out2, ref2, atol=1e-3, rtol=1e-3), float(jnp.max(jnp.abs(out2 - ref2)))

    print("KERNEL_OK")
</pallas_src>

<mosaic_0001>
module attributes {stable_mosaic.version = 11 : i64} {
  func.func @_lora_kernel(%arg0: i32, %arg1: memref<8x32xf32, #tpu.memory_space<vmem>>, %arg2: memref<8x32xf32, #tpu.memory_space<vmem>>, %arg3: memref<64x8xf32, #tpu.memory_space<vmem>>, %arg4: memref<8x64xf32, #tpu.memory_space<vmem>>) attributes {dimension_semantics = [#tpu.dimension_semantics<parallel>], iteration_bounds = array<i64: 1>, scalar_prefetch = 0 : i64, scratch_operands = 0 : i64, tpu.core_type = #tpu.core_type<tc>, window_params = [{transform_indices = @transform_0, window_bounds = array<i64: 8, 32>}, {pipeline_mode = #tpu.pipeline_mode<synchronous>, transform_indices = @transform_1, window_bounds = array<i64: 8, 32>}, {pipeline_mode = #tpu.pipeline_mode<synchronous>, transform_indices = @transform_2, window_bounds = array<i64: 64, 8>}, {transform_indices = @transform_3, window_bounds = array<i64: 8, 64>}]} {
    %c0 = arith.constant 0 : index
    %c0_0 = arith.constant 0 : index
    %0 = vector.load %arg1[%c0, %c0_0] : memref<8x32xf32, #tpu.memory_space<vmem>>, vector<8x32xf32>
    %c0_1 = arith.constant 0 : index
    %c0_2 = arith.constant 0 : index
    %1 = vector.load %arg2[%c0_1, %c0_2] : memref<8x32xf32, #tpu.memory_space<vmem>>, vector<8x32xf32>
    %cst = arith.constant dense<0.000000e+00> : vector<8x8xf32>
    %2 = tpu.matmul %0, %1, %cst {dimension_numbers = #tpu.dot_dimension_numbers<[1], [1], [0], [0], [0, 0, 1, 0], [], []>} : vector<8x32xf32>, vector<8x32xf32>, vector<8x8xf32> -> vector<8x8xf32>
    %cst_3 = arith.constant 5.000000e-01 : f32
    %3 = vector.broadcast %cst_3 : f32 to vector<8x8xf32>
    %4 = arith.mulf %2, %3 : vector<8x8xf32>
    %c0_4 = arith.constant 0 : index
    %c0_5 = arith.constant 0 : index
    %5 = vector.load %arg3[%c0_4, %c0_5] : memref<64x8xf32, #tpu.memory_space<vmem>>, vector<64x8xf32>
    %cst_6 = arith.constant dense<0.000000e+00> : vector<8x64xf32>
    %6 = tpu.matmul %4, %5, %cst_6 {dimension_numbers = #tpu.dot_dimension_numbers<[1], [1], [0], [0], [0, 0, 1, 0], [], []>} : vector<8x8xf32>, vector<64x8xf32>, vector<8x64xf32> -> vector<8x64xf32>
    %c0_7 = arith.constant 0 : index
    %c0_8 = arith.constant 0 : index
    %7 = vector.load %arg4[%c0_7, %c0_8] : memref<8x64xf32, #tpu.memory_space<vmem>>, vector<8x64xf32>
    tpu.vector_store %arg4[%c0_7, %c0_8], %6 {strides = array<i32>} : memref<8x64xf32, #tpu.memory_space<vmem>>, vector<8x64xf32>,
    return
  }
  func.func @transform_0(%arg0: i32) -> (i32, i32) {
    %c0_i32 = arith.constant 0 : i32
    %c0_i32_0 = arith.constant 0 : i32
    return %arg0, %c0_i32 : i32, i32
  }
  func.func @transform_1(%arg0: i32) -> (i32, i32) {
    %c0_i32 = arith.constant 0 : i32
    %c0_i32_0 = arith.constant 0 : i32
    %c0_i32_1 = arith.constant 0 : i32
    return %c0_i32, %c0_i32_0 : i32, i32
  }
  func.func @transform_2(%arg0: i32) -> (i32, i32) {
    %c0_i32 = arith.constant 0 : i32
    %c0_i32_0 = arith.constant 0 : i32
    %c0_i32_1 = arith.constant 0 : i32
    return %c0_i32, %c0_i32_0 : i32, i32
  }
  func.func @transform_3(%arg0: i32) -> (i32, i32) {
    %c0_i32 = arith.constant 0 : i32
    %c0_i32_0 = arith.constant 0 : i32
    return %arg0, %c0_i32 : i32, i32
  }
}

</mosaic_0001>

<llo_original>
// kernel: tpu_custom_call.1
$region0: #{tpu_custom_call.1}
  #allocation0 [shape = 'u32[]', space=smem, size = 0x4, offset = 0x4, fixed_abs, tag = 'smem constant byte address 0x4 - core index']
  #allocation1 [shape = 'u32[144,128]{1,0:T(1,128)}', space=vmem, size = 0x12000, scoped, tag = 'internal scratch']
  %s0 = inlined_call_operand.vmem [shape: f32[8,32], index: 0, kind: input, shape index: {}]
  %s1 = inlined_call_operand.vmem [shape: f32[8,32], index: 1, kind: input, shape index: {}]
  %s2 = inlined_call_operand.vmem [shape: f32[64,8], index: 2, kind: input, shape index: {}]
  %s3 = inlined_call_operand.hbm [shape: f32[8,64], index: 3, kind: output, shape index: {}]
  %s4 = sld [smem:[#allocation0]]
  $region22: #{tpu_custom_call.1} parent=0
    _
  %s6 = ssub.s32 1, %s4
  %s7 = scalar_select 0, %s6, %s4
  $region1: #{tpu_custom_call.1} parent=0
    #allocation2 [shape = 'u8[4096]{0}', space=vmem, size = 0x1000, scoped, tag = 'output window, operand 0, single buffered']
    #allocation3 [shape = 's32[1]{0}', space=sflag, size = 0x4, scoped, tag = 'scoped memory for tpu_custom_call.1']
    %8 = vsyncpa [#allocation3], 0
    // Predicated region
    $region2: #{tpu_custom_call.1} parent=1 // pred_check
      _
    $region3: #{tpu_custom_call.1} parent=1 // pred_check_branch
      %10 = sbr.rel (0) target = $region5
    $region4: #{tpu_custom_call.1} parent=1 // pred_region
      _
    $region5: #{tpu_custom_call.1} parent=1 // pred_fallthru
      _
    // Predicated region
    $region6: #{tpu_custom_call.1} parent=1 // pred_check
      _
    $region7: #{tpu_custom_call.1} parent=1 // pred_check_branch
      %12 = sbr.rel (0) target = $region9
    $region8: #{tpu_custom_call.1} parent=1 // pred_region
      _
    $region9: #{tpu_custom_call.1} parent=1 // pred_fallthru
      _
    // Predicated region
    $region10: #{tpu_custom_call.1} parent=1 // pred_check
      _
    $region11: #{tpu_custom_call.1} parent=1 // pred_check_branch
      %14 = sbr.rel (0) target = $region13
    $region12: #{tpu_custom_call.1} parent=1 // pred_region
      _
    $region13: #{tpu_custom_call.1} parent=1 // pred_fallthru
      _
    %v15 = vld [vmem:[%s0] sm:$0xff]
    %v16 = vld [vmem:[%s1] sm:$0xff]
    %vm17 = vcmask 261120
    %v19 = vsel %vm17, %v15, 0
    %v22 = vsel %vm17, %v16, 0
    %24 = vmatprep.subr.mxu0 0.0
    %25 = vmatpush1.xpose.msra.mxu0 0.0
    %26 = vmatprep.subr.mxu0 0.0
    %27 = vmatpush1.xpose.msra.mxu0 0.0
    %28 = vmatprep.subr.mxu0 0.0
    %29 = vmatpush1.xpose.msra.mxu0 0.0
    %30 = vmatprep.subr.mxu0 0.0
    %31 = vmatpush1.xpose.msra.mxu0 0.0
    %32 = vmatprep.subr.mxu0 0.0
    %33 = vmatpush1.xpose.msra.mxu0 0.0
    %34 = vmatprep.subr.mxu0 0.0
    %35 = vmatpush1.xpose.msra.mxu0 0.0
    %36 = vmatprep.subr.mxu0 0.0
    %37 = vmatpush1.xpose.msra.mxu0 0.0
    %38 = vmatprep.subr.mxu0 0.0
    %39 = vmatpush1.xpose.msra.mxu0 0.0
    %40 = vmatprep.subr.mxu0 0.0
    %41 = vmatpush1.xpose.msra.mxu0 0.0
    %42 = vmatprep.subr.mxu0 0.0
    %43 = vmatpush1.xpose.msra.mxu0 0.0
    %44 = vmatprep.subr.mxu0 0.0
    %45 = vmatpush1.xpose.msra.mxu0 0.0
    %46 = vmatprep.subr.mxu0 0.0
    %47 = vmatpush1.xpose.msra.mxu0 0.0
    %48 = vmatprep.subr.mxu0 0.0
    %49 = vmatpush1.xpose.msra.mxu0 0.0
    %50 = vmatprep.subr.mxu0 0.0
    %51 = vmatpush1.xpose.msra.mxu0 0.0
    %52 = vmatprep.subr.mxu0 0.0
    %53 = vmatpush1.xpose.msra.mxu0 0.0
    %54 = vmatprep.subr.mxu0 0.0
    %55 = vmatpush1.xpose.msra.mxu0 %v22
    %56 = vmatprep.subr.mxu0 0.0
    %57 = vmatpush2.xpose.msra.mxu0 0.0
    %58 = vmatprep.subr.mxu0 0.0
    %59 = vmatpush2.xpose.msra.mxu0 0.0
    %60 = vmatprep.subr.mxu0 0.0
    %61 = vmatpush2.xpose.msra.mxu0 0.0
    %62 = vmatprep.subr.mxu0 0.0
    %63 = vmatpush2.xpose.msra.mxu0 0.0
    %64 = vmatprep.subr.mxu0 0.0
    %65 = vmatpush2.xpose.msra.mxu0 0.0
    %66 = vmatprep.subr.mxu0 0.0
    %67 = vmatpush2.xpose.msra.mxu0 0.0
    %68 = vmatprep.subr.mxu0 0.0
    %69 = vmatpush2.xpose.msra.mxu0 0.0
    %70 = vmatprep.subr.mxu0 0.0
    %71 = vmatpush2.xpose.msra.mxu0 0.0
    %72 = vmatprep.subr.mxu0 0.0
    %73 = vmatpush2.xpose.msra.mxu0 0.0
    %74 = vmatprep.subr.mxu0 0.0
    %75 = vmatpush2.xpose.msra.mxu0 0.0
    %76 = vmatprep.subr.mxu0 0.0
    %77 = vmatpush2.xpose.msra.mxu0 0.0
    %78 = vmatprep.subr.mxu0 0.0
    %79 = vmatpush2.xpose.msra.mxu0 0.0
    %80 = vmatprep.subr.mxu0 0.0
    %81 = vmatpush2.xpose.msra.mxu0 0.0
    %82 = vmatprep.subr.mxu0 0.0
    %83 = vmatpush2.xpose.msra.mxu0 0.0
    %84 = vmatprep.subr.mxu0 0.0
    %85 = vmatpush2.xpose.msra.mxu0 0.0
    %86 = vmatprep.subr.mxu0 0.0
    %87 = vmatpush2.xpose.msra.mxu0 0.0
    %88 = vmatprep.mubr.f32.mxu0 0.0
    %89 = vmatmul.mubr.f32.gmra.mxu0 %v19
    %v90 = vpop.f32.mrf.mxu0
    %v91 = vadd.f32 0.0, %v90
    %v92 = vpop.f32.mrf.mxu0
    %93 = vdwg.mxu0
    %v94 = vmul.f32 %v91, 0.5
    %v95 = vld [vmem:[%s2] sm:$0xff]
    %v96 = vld [vmem:[%s2 + $0x8] sm:$0xff]
    %v97 = vld [vmem:[%s2 + $0x10] sm:$0xff]
    %v98 = vld [vmem:[%s2 + $0x18] sm:$0xff]
    %v99 = vld [vmem:[%s2 + $0x20] sm:$0xff]
    %v100 = vld [vmem:[%s2 + $0x28] sm:$0xff]
    %v101 = vld [vmem:[%s2 + $0x30] sm:$0xff]
    %v102 = vld [vmem:[%s2 + $0x38] sm:$0xff]
    %vm103 = vcmask 64512
    %v105 = vsel %vm103, %v94, 0
    %v108 = vsel %vm103, %v95, 0
    %v111 = vsel %vm103, %v96, 0
    %v114 = vsel %vm103, %v97, 0
    %v117 = vsel %vm103, %v98, 0
    %v120 = vsel %vm103, %v99, 0
    %v123 = vsel %vm103, %v100, 0
    %v126 = vsel %vm103, %v101, 0
    %v129 = vsel %vm103, %v102, 0
    %131 = vmatprep.subr.mxu0 0.0
    %132 = vmatpush1.xpose.msra.mxu0 0.0
    %133 = vmatprep.subr.mxu0 0.0
    %134 = vmatpush1.xpose.msra.mxu0 0.0
    %135 = vmatprep.subr.mxu0 0.0
    %136 = vmatpush1.xpose.msra.mxu0 0.0
    %137 = vmatprep.subr.mxu0 0.0
    %138 = vmatpush1.xpose.msra.mxu0 0.0
    %139 = vmatprep.subr.mxu0 0.0
    %140 = vmatpush1.xpose.msra.mxu0 0.0
    %141 = vmatprep.subr.mxu0 0.0
    %142 = vmatpush1.xpose.msra.mxu0 0.0
    %143 = vmatprep.subr.mxu0 0.0
    %144 = vmatpush1.xpose.msra.mxu0 0.0
    %145 = vmatprep.subr.mxu0 0.0
    %146 = vmatpush1.xpose.msra.mxu0 0.0
    %147 = vmatprep.subr.mxu0 0.0
    %148 = vmatpush1.xpose.msra.mxu0 %v129
    %149 = vmatprep.subr.mxu0 0.0
    %150 = vmatpush1.xpose.msra.mxu0 %v126
    %151 = vmatprep.subr.mxu0 0.0
    %152 = vmatpush1.xpose.msra.mxu0 %v123
    %153 = vmatprep.subr.mxu0 0.0
    %154 = vmatpush1.xpose.msra.mxu0 %v120
    %155 = vmatprep.subr.mxu0 0.0
    %156 = vmatpush1.xpose.msra.mxu0 %v117
    %157 = vmatprep.subr.mxu0 0.0
    %158 = vmatpush1.xpose.msra.mxu0 %v114
    %159 = vmatprep.subr.mxu0 0.0
    %160 = vmatpush1.xpose.msra.mxu0 %v111
    %161 = vmatprep.subr.mxu0 0.0
    %162 = vmatpush1.xpose.msra.mxu0 %v108
    %163 = vmatprep.subr.mxu0 0.0
    %164 = vmatpush2.xpose.msra.mxu0 0.0
    %165 = vmatprep.subr.mxu0 0.0
    %166 = vmatpush2.xpose.msra.mxu0 0.0
    %167 = vmatprep.subr.mxu0 0.0
    %168 = vmatpush2.xpose.msra.mxu0 0.0
    %169 = vmatprep.subr.mxu0 0.0
    %170 = vmatpush2.xpose.msra.mxu0 0.0
    %171 = vmatprep.subr.mxu0 0.0
    %172 = vmatpush2.xpose.msra.mxu0 0.0
    %173 = vmatprep.subr.mxu0 0.0
    %174 = vmatpush2.xpose.msra.mxu0 0.0
    %175 = vmatprep.subr.mxu0 0.0
    %176 = vmatpush2.xpose.msra.mxu0 0.0
    %177 = vmatprep.subr.mxu0 0.0
    %178 = vmatpush2.xpose.msra.mxu0 0.0
    %179 = vmatprep.subr.mxu0 0.0
    %180 = vmatpush2.xpose.msra.mxu0 0.0
    %181 = vmatprep.subr.mxu0 0.0
    %182 = vmatpush2.xpose.msra.mxu0 0.0
    %183 = vmatprep.subr.mxu0 0.0
    %184 = vmatpush2.xpose.msra.mxu0 0.0
    %185 = vmatprep.subr.mxu0 0.0
    %186 = vmatpush2.xpose.msra.mxu0 0.0
    %187 = vmatprep.subr.mxu0 0.0
    %188 = vmatpush2.xpose.msra.mxu0 0.0
    %189 = vmatprep.subr.mxu0 0.0
    %190 = vmatpush2.xpose.msra.mxu0 0.0
    %191 = vmatprep.subr.mxu0 0.0
    %192 = vmatpush2.xpose.msra.mxu0 0.0
    %193 = vmatprep.subr.mxu0 0.0
    %194 = vmatpush2.xpose.msra.mxu0 0.0
    %195 = vmatprep.mubr.f32.mxu0 0.0
    %196 = vmatmul.mubr.f32.gmra.mxu0 %v105
    %v197 = vpop.f32.mrf.mxu0
    %v198 = vadd.f32 0.0, %v197
    %v199 = vpop.f32.mrf.mxu0
    %200 = vdwg.mxu0
    %vm201 = vcmask 523264
    %202 = vst.msk [vmem:[#allocation2] sm:$0xff] %vm201, %v198
    // Predicated region
    $region14: #{tpu_custom_call.1} parent=1 // pred_check
      _
    $region15: #{tpu_custom_call.1} parent=1 // pred_check_branch
      %204 = sbr.rel (0) target = $region17
    $region16: #{tpu_custom_call.1} parent=1 // pred_region
      %s206 = ssub.s32 128, 128
      %207 = vsyncadd [#allocation3], %s206
      %s209 = sshll.u32 [#allocation2], 4
      %s210 = int_to_ptr.vmem [resolvable:$true] %s209
      %212 = dma.vmem_to_hbm [thread:$0]  %s210, 128, %s3, [#allocation3]
    $region17: #{tpu_custom_call.1} parent=1 // pred_fallthru
      _
    // Predicated region
    $region18: #{tpu_custom_call.1} parent=1 // pred_check
      _
    $region19: #{tpu_custom_call.1} parent=1 // pred_check_branch
      %214 = sbr.rel (0) target = $region21
    $region20: #{tpu_custom_call.1} parent=1 // pred_region
      %215 = dma.done [#allocation3], 128
    $region21: #{tpu_custom_call.1} parent=1 // pred_fallthru
      _
    %216 = vsyncpa [#allocation3], 1

</llo_original>
